<compile_context>
chip_gen: v5e
topology: v5e:2x2
jax: 0.10.0
libtpu: 0.0.40
codegen_flags: <defaults>
</compile_context>

<pallas_src>
import jax
import jax.numpy as jnp
from jax.experimental import pallas as pl
from jax.experimental.pallas import tpu as pltpu

_LANE = 128           # vreg lane width
_SUBLANE = 8          # vreg sublane count (f32)
_TILE_COLS = 1024     # lane-dense slab width for large inputs (8 vregs wide)
_TILE_ROWS = 512      # 512x1024 f32 = 2 MiB/tile -> 12 MiB with 3 arrays x 2 buffers


def _round_up(x, m):
    return ((x + m - 1) // m) * m


# ---------------------------------------------------------------------------
# Tiled blend kernel: out = a_G * v_G + a_L * v_L
# coeff lives in SMEM (broadcast scalars), value tiles stream through VMEM.
# One VPU multiply-add chain per vreg, unmasked lane-dense store.
# ---------------------------------------------------------------------------
def _blend_kernel(coeff_ref, vg_ref, vl_ref, out_ref):
    a_g = coeff_ref[0]
    a_l = coeff_ref[1]
    out_ref[...] = (
        a_g * vg_ref[...].astype(jnp.float32)
        + a_l * vl_ref[...].astype(jnp.float32)
    ).astype(out_ref.dtype)


@jax.jit
def _batched_blend(coeff, v_g, v_l):
    """Grid-tiled, lane-dense blend of two value tensors of any shape."""
    orig_shape = v_g.shape
    out_dtype = v_g.dtype
    n = int(v_g.size)

    # Lane-dense 2-D slab: small inputs use 128 lanes (avoids over-padding),
    # large inputs use a 1024-lane slab for fewer, fatter grid steps.
    cols = _TILE_COLS if n >= _TILE_COLS * _SUBLANE else _LANE
    rows = _round_up((n + cols - 1) // cols, _SUBLANE)
    tile_rows = min(_TILE_ROWS, rows)           # both multiples of 8
    rows = _round_up(rows, tile_rows)           # grid divides exactly
    pad = rows * cols - n

    flat_g = jnp.ravel(v_g)
    flat_l = jnp.ravel(v_l)
    if pad:
        flat_g = jnp.pad(flat_g, (0, pad))
        flat_l = jnp.pad(flat_l, (0, pad))
    vg2 = flat_g.reshape(rows, cols)
    vl2 = flat_l.reshape(rows, cols)

    grid = (rows // tile_rows,)
    itemsize = jnp.dtype(out_dtype).itemsize

    out2 = pl.pallas_call(
        _blend_kernel,
        out_shape=jax.ShapeDtypeStruct((rows, cols), out_dtype),
        grid_spec=pltpu.PrefetchScalarGridSpec(
            num_scalar_prefetch=0,
            grid=grid,
            in_specs=[
                # (2,) blend coefficients, untiled, in SMEM.
                pl.BlockSpec((2,), lambda i: (0,),
                             memory_space=pltpu.MemorySpace.SMEM),
                pl.BlockSpec((tile_rows, cols), lambda i: (i, 0)),
                pl.BlockSpec((tile_rows, cols), lambda i: (i, 0)),
            ],
            out_specs=pl.BlockSpec((tile_rows, cols), lambda i: (i, 0)),
        ),
        compiler_params=pltpu.CompilerParams(
            dimension_semantics=("parallel",)),   # megacore split on v7x
        cost_estimate=pl.CostEstimate(
            flops=3 * rows * cols,
            transcendentals=0,
            bytes_accessed=3 * rows * cols * itemsize),
    )(coeff, vg2, vl2)

    out = out2.reshape(-1)
    if pad:
        out = out[:n]
    return out.reshape(orig_shape)


class LinearValueModel:
    """JAX/Pallas port of the PyTorch LinearValueModel."""

    def __init__(self, w_G_init=0.5, w_L_init=0.5, w_B_init=0.0):
        self.w_G = jnp.asarray(w_G_init, dtype=jnp.float32)
        self.w_L = jnp.asarray(w_L_init, dtype=jnp.float32)
        self.w_B = jnp.asarray(w_B_init, dtype=jnp.float32)  # unused in forward (torch parity)
        # TODO(synk): trainable-parameter updates / logger have no Pallas equivalent; weights are plain arrays here.

    def _coefficients(self):
        # Recomputed from the *current* weights each call (never stale);
        # divide is hoisted out of the per-element kernel.  w_G + w_L == 0
        # yields NaN, same mathematical hazard as the torch module.
        denom = self.w_G + self.w_L
        return jnp.stack([self.w_G / denom, self.w_L / denom]).astype(jnp.float32)

    def __call__(self, v_G, v_L=None):
        if v_L is None:
            return jnp.asarray(v_G)           # passthrough branch
        v_G = jnp.asarray(v_G)
        v_L = jnp.asarray(v_L)
        coeff = self._coefficients()
        if v_G.ndim == 0:
            # Scalar case (the literal torch semantics): two FMAs — plain jnp
            # fuses into the caller; a pallas_call here is pure launch overhead.
            return coeff[0] * v_G.astype(jnp.float32) + coeff[1] * v_L.astype(jnp.float32)
        # Batched value tensors: tiled, lane-dense Pallas kernel.
        return _batched_blend(coeff, v_G, v_L)


if __name__ == "__main__":
    key = jax.random.PRNGKey(0)
    k1, k2, k3, k4 = jax.random.split(key, 4)

    model = LinearValueModel(w_G_init=0.5, w_L_init=0.5, w_B_init=0.0)

    # --- scalar path (exact torch-module semantics) --------------------------
    v_G = jax.random.uniform(k1, (), dtype=jnp.float32)
    v_L = jax.random.uniform(k2, (), dtype=jnp.float32)
    v_pred = jax.block_until_ready(model(v_G, v_L))
    ref = (0.5 * v_G + 0.5 * v_L) / (0.5 + 0.5)
    assert jnp.allclose(v_pred, ref, atol=1e-6), (v_pred, ref)

    # v_L = None passthrough branch.
    passthrough = jax.block_until_ready(model(v_G, None))
    assert jnp.allclose(passthrough, v_G)

    # --- batched path through the Pallas kernel (small 4-D value tensor) -----
    vb_G = jax.random.uniform(k3, (2, 4, 16, 16), dtype=jnp.float32)
    vb_L = jax.random.uniform(k4, (2, 4, 16, 16), dtype=jnp.float32)
    vb_pred = jax.block_until_ready(model(vb_G, vb_L))
    ref_b = (0.5 * vb_G + 0.5 * vb_L) / (0.5 + 0.5)
    assert jnp.allclose(vb_pred, ref_b, atol=1e-6), "batched blend mismatch"

    # --- lane-dense shape that maps to exactly one f32 vreg tile -------------
    vc_G = jax.random.uniform(k1, (8, 128), dtype=jnp.float32)
    vc_L = jax.random.uniform(k2, (8, 128), dtype=jnp.float32)
    vc_pred = jax.block_until_ready(model(vc_G, vc_L))
    assert jnp.allclose(vc_pred, 0.5 * vc_G + 0.5 * vc_L, atol=1e-6), "vreg blend mismatch"

    print("KERNEL_OK")
</pallas_src>

<mosaic_0001>
module attributes {stable_mosaic.version = 11 : i64} {
  func.func @_blend_kernel(%arg0: i32, %arg1: memref<2xf32, #tpu.memory_space<smem>>, %arg2: memref<16x128xf32, #tpu.memory_space<vmem>>, %arg3: memref<16x128xf32, #tpu.memory_space<vmem>>, %arg4: memref<16x128xf32, #tpu.memory_space<vmem>>) attributes {dimension_semantics = [#tpu.dimension_semantics<parallel>], iteration_bounds = array<i64: 1>, scalar_prefetch = 0 : i64, scratch_operands = 0 : i64, tpu.core_type = #tpu.core_type<tc>, window_params = [{transform_indices = @transform_0, window_bounds = array<i64: 2>}, {transform_indices = @transform_1, window_bounds = array<i64: 16, 128>}, {transform_indices = @transform_2, window_bounds = array<i64: 16, 128>}, {transform_indices = @transform_3, window_bounds = array<i64: 16, 128>}]} {
    %c0 = arith.constant 0 : index
    %0 = memref.load %arg1[%c0] : memref<2xf32, #tpu.memory_space<smem>>
    %c1 = arith.constant 1 : index
    %1 = memref.load %arg1[%c1] : memref<2xf32, #tpu.memory_space<smem>>
    %c0_0 = arith.constant 0 : index
    %c0_1 = arith.constant 0 : index
    %2 = vector.load %arg2[%c0_0, %c0_1] : memref<16x128xf32, #tpu.memory_space<vmem>>, vector<16x128xf32>
    %3 = vector.broadcast %0 : f32 to vector<16x128xf32>
    %4 = arith.mulf %3, %2 : vector<16x128xf32>
    %c0_2 = arith.constant 0 : index
    %c0_3 = arith.constant 0 : index
    %5 = vector.load %arg3[%c0_2, %c0_3] : memref<16x128xf32, #tpu.memory_space<vmem>>, vector<16x128xf32>
    %6 = vector.broadcast %1 : f32 to vector<16x128xf32>
    %7 = arith.mulf %6, %5 : vector<16x128xf32>
    %8 = arith.addf %4, %7 : vector<16x128xf32>
    %c0_4 = arith.constant 0 : index
    %c0_5 = arith.constant 0 : index
    %9 = vector.load %arg4[%c0_4, %c0_5] : memref<16x128xf32, #tpu.memory_space<vmem>>, vector<16x128xf32>
    tpu.vector_store %arg4[%c0_4, %c0_5], %8 {strides = array<i32>} : memref<16x128xf32, #tpu.memory_space<vmem>>, vector<16x128xf32>,
    return
  }
  func.func @transform_0(%arg0: i32) -> i32 {
    %c0_i32 = arith.constant 0 : i32
    %c0_i32_0 = arith.constant 0 : i32
    return %c0_i32 : i32
  }
  func.func @transform_1(%arg0: i32) -> (i32, i32) {
    %c0_i32 = arith.constant 0 : i32
    %c0_i32_0 = arith.constant 0 : i32
    return %arg0, %c0_i32 : i32, i32
  }
  func.func @transform_2(%arg0: i32) -> (i32, i32) {
    %c0_i32 = arith.constant 0 : i32
    %c0_i32_0 = arith.constant 0 : i32
    return %arg0, %c0_i32 : i32, i32
  }
  func.func @transform_3(%arg0: i32) -> (i32, i32) {
    %c0_i32 = arith.constant 0 : i32
    %c0_i32_0 = arith.constant 0 : i32
    return %arg0, %c0_i32 : i32, i32
  }
}

</mosaic_0001>

<llo_original>
// kernel: _batched_blend.1
$region0: #{_batched_blend.1}
  #allocation0 [shape = 'u32[]', space=smem, size = 0x4, offset = 0x4, fixed_abs, tag = 'smem constant byte address 0x4 - core index']
  #allocation1 [shape = 'u32[72,128]{1,0:T(1,128)}', space=vmem, size = 0x9000, scoped, tag = 'internal scratch']
  %s0 = inlined_call_operand.vmem [shape: f32[2], index: 0, kind: input, shape index: {}]
  %s1 = inlined_call_operand.vmem [shape: f32[16,128], index: 1, kind: input, shape index: {}]
  %s2 = inlined_call_operand.vmem [shape: f32[16,128], index: 2, kind: input, shape index: {}]
  %s3 = inlined_call_operand.vmem [shape: f32[16,128], index: 3, kind: output, shape index: {}]
  %s4 = sld [smem:[#allocation0]]
  $region26: #{_batched_blend.1} parent=0
    _
  %s6 = ssub.s32 1, %s4
  %s7 = scalar_select 0, %s6, %s4
  $region1: #{_batched_blend.1} parent=0
    #allocation2 [shape = 'u8[512]{0}', space=smem, size = 0x200, scoped, tag = 'input window, operand 0, single buffered']
    #allocation3 [shape = 's32[1]{0}', space=sflag, size = 0x4, scoped, tag = 'scoped memory for _batched_blend.1']
    %8 = vsyncpa [#allocation3], 0
    // Predicated region
    $region2: #{_batched_blend.1} parent=1 // pred_check
      _
    $region3: #{_batched_blend.1} parent=1 // pred_check_branch
      %10 = sbr.rel (0) target = $region5
    $region4: #{_batched_blend.1} parent=1 // pred_region
      %12 = vsyncadd [#allocation3], 0
      %s14 = sshll.u32 %s0, 4
      %s15 = int_to_ptr.vmem [resolvable:$true] %s14
      %17 = dma.vmem_to_smem %s15, 16, [#allocation2], [#allocation3]
    $region5: #{_batched_blend.1} parent=1 // pred_fallthru
      _
    // Predicated region
    $region6: #{_batched_blend.1} parent=1 // pred_check
      _
    $region7: #{_batched_blend.1} parent=1 // pred_check_branch
      %19 = sbr.rel (0) target = $region9
    $region8: #{_batched_blend.1} parent=1 // pred_region
      _
    $region9: #{_batched_blend.1} parent=1 // pred_fallthru
      _
    // Predicated region
    $region10: #{_batched_blend.1} parent=1 // pred_check
      _
    $region11: #{_batched_blend.1} parent=1 // pred_check_branch
      %21 = sbr.rel (0) target = $region13
    $region12: #{_batched_blend.1} parent=1 // pred_region
      _
    $region13: #{_batched_blend.1} parent=1 // pred_fallthru
      _
    // Predicated region
    $region14: #{_batched_blend.1} parent=1 // pred_check
      _
    $region15: #{_batched_blend.1} parent=1 // pred_check_branch
      %23 = sbr.rel (0) target = $region17
    $region16: #{_batched_blend.1} parent=1 // pred_region
      %25 = dma.done [#allocation3], 16
    $region17: #{_batched_blend.1} parent=1 // pred_fallthru
      _
    %26 = sfence
    %s27 = sld [smem:[#allocation2]]
    %s28 = sld [smem:[#allocation2 + $0x1]]
    %v29 = vld [vmem:[%s1] sm:$0xff]
    %v30 = vld [vmem:[%s1 + $0x8] sm:$0xff]
    %v31 = vstv %s27
    %v32 = vmul.f32 %v31, %v29
    %v33 = vmul.f32 %v31, %v30
    %v34 = vld [vmem:[%s2] sm:$0xff]
    %v35 = vld [vmem:[%s2 + $0x8] sm:$0xff]
    %v36 = vstv %s28
    %v37 = vmul.f32 %v36, %v34
    %v38 = vmul.f32 %v36, %v35
    %v39 = vadd.f32 %v32, %v37
    %v40 = vadd.f32 %v33, %v38
    %41 = vst [vmem:[%s3] sm:$0xff] %v39
    %42 = vst [vmem:[%s3 + $0x8] sm:$0xff] %v40
    // Predicated region
    $region18: #{_batched_blend.1} parent=1 // pred_check
      _
    $region19: #{_batched_blend.1} parent=1 // pred_check_branch
      %44 = sbr.rel (0) target = $region21
    $region20: #{_batched_blend.1} parent=1 // pred_region
      _
    $region21: #{_batched_blend.1} parent=1 // pred_fallthru
      _
    // Predicated region
    $region22: #{_batched_blend.1} parent=1 // pred_check
      _
    $region23: #{_batched_blend.1} parent=1 // pred_check_branch
      %46 = sbr.rel (0) target = $region25
    $region24: #{_batched_blend.1} parent=1 // pred_region
      _
    $region25: #{_batched_blend.1} parent=1 // pred_fallthru
      _
    %47 = vsyncpa [#allocation3], 1

</llo_original>
